<compile_context>
chip_gen: v7x
topology: tpu7x:2x2x1
jax: 0.10.0
libtpu: 0.0.40
codegen_flags: <defaults>
</compile_context>

<pallas_src>
import jax
import jax.numpy as jnp
from jax.experimental import pallas as pl
from jax.experimental.pallas import tpu as pltpu


def _pseudo_quant_kernel(x_ref, emb_ref, o_ref):
    # x_ref:   (1, TS, D_in)   one batch element, one S-tile
    # emb_ref: (D_in, D_out)   full embedding (constant across the grid)
    # o_ref:   (1, TS, D_out)
    emb = emb_ref[...]                                   # native dtype (bf16 -> bf16 MXU)
    x = x_ref[0]                                         # (TS, D_in), native dtype
    xf = x.astype(jnp.float32)                           # f32 softmax math (v5e-safe)

    # numerically stable softmax along the lane (last) axis
    m = jnp.max(xf, axis=-1, keepdims=True)              # XLU reduce
    e = jnp.exp(xf - m)                                  # EUP
    denom = jnp.sum(e, axis=-1, keepdims=True)           # XLU reduce
    p = e * pl.reciprocal(denom, approx=False)           # exact: keeps 1e-5 tolerance

    # MXU: (TS, D_in) @ (D_in, D_out) with f32 accumulation; operands stay in
    # the embedding's dtype so a bf16 embedding runs at bf16 MXU rate.
    y = jnp.dot(p.astype(emb.dtype), emb,
                preferred_element_type=jnp.float32)
    o_ref[0] = y.astype(o_ref.dtype)

    # y[:, 0, :] = x[:, 0, :] : overwrite only the very first sequence row.
    # Single-row store (gated on the first S-tile) instead of iota + select.
    @pl.when(pl.program_id(1) == 0)
    def _():
        o_ref[0, 0:1, :] = x_ref[0, 0:1, :].astype(o_ref.dtype)


def embedding_pseudo_quantizer(x, embedding, *, s_tile=None):
    """x: (B, S, D_in) float, embedding: (D_in, D_out). Returns (B, S, D_out)."""
    B, S, D_in = x.shape
    D_in_e, D_out = embedding.shape
    assert D_in == D_in_e
    assert D_in == D_out, "row-0 overwrite requires in_dim == out_dim"

    # S-tile: full S when small; otherwise a few hundred rows to amortize the
    # ~0.35us per-grid-step overhead while staying inside v7x's 64 MiB VMEM.
    if s_tile is None:
        s_tile = S
        if S > 512:
            for cand in (512, 256, 128, 64, 32, 16, 8):
                if S % cand == 0:
                    s_tile = cand
                    break
    assert S % s_tile == 0
    num_s = S // s_tile

    x_isz = jnp.dtype(x.dtype).itemsize
    e_isz = jnp.dtype(embedding.dtype).itemsize
    # double-buffered x and out tiles + double-buffered embedding + f32 temps
    est_vmem = (2 * s_tile * D_in * x_isz
                + 2 * s_tile * D_out * x_isz
                + 2 * D_in * D_out * e_isz
                + 3 * s_tile * max(D_in, D_out) * 4)

    cp_kwargs = dict(dimension_semantics=("parallel", "parallel"))
    if est_vmem > 24 * 1024 * 1024:
        cp_kwargs["vmem_limit_bytes"] = min(2 * est_vmem, 100 * 1024 * 1024)

    return pl.pallas_call(
        _pseudo_quant_kernel,
        out_shape=jax.ShapeDtypeStruct((B, S, D_out), x.dtype),
        grid_spec=pltpu.PrefetchScalarGridSpec(
            num_scalar_prefetch=0,
            grid=(B, num_s),
            in_specs=[
                pl.BlockSpec((1, s_tile, D_in), lambda b, s: (b, s, 0)),
                pl.BlockSpec((D_in, D_out), lambda b, s: (0, 0)),
            ],
            out_specs=pl.BlockSpec((1, s_tile, D_out), lambda b, s: (b, s, 0)),
        ),
        compiler_params=pltpu.CompilerParams(**cp_kwargs),
    )(x, embedding)


def _reference(x, embedding):
    p = jax.nn.softmax(x.astype(jnp.float32), axis=-1)
    y = p @ embedding.astype(jnp.float32)
    y = y.at[:, 0, :].set(x[:, 0, :].astype(jnp.float32))
    return y.astype(x.dtype)


if __name__ == "__main__":
    key = jax.random.PRNGKey(0)
    kx, ke = jax.random.split(key)

    B, S, D = 2, 8, 32          # in_dim == out_dim == 32
    x = jax.random.normal(kx, (B, S, D), dtype=jnp.float32)
    # deterministic init matching torch.empty(in_dim, out_dim).uniform_(-1, 1)
    embedding = jax.random.uniform(ke, (D, D), minval=-1.0, maxval=1.0,
                                   dtype=jnp.float32)

    y = embedding_pseudo_quantizer(x, embedding)
    y = jax.block_until_ready(y)

    y_ref = _reference(x, embedding)
    assert jnp.allclose(y, y_ref, atol=1e-5, rtol=1e-5), "mismatch vs reference"

    print("KERNEL_OK")
</pallas_src>

<mosaic_0001>
module attributes {stable_mosaic.version = 11 : i64} {
  func.func @_pseudo_quant_kernel(%arg0: i32, %arg1: i32, %arg2: memref<1x8x32xf32, #tpu.memory_space<vmem>>, %arg3: memref<32x32xf32, #tpu.memory_space<vmem>>, %arg4: memref<1x8x32xf32, #tpu.memory_space<vmem>>) attributes {dimension_semantics = [#tpu.dimension_semantics<parallel>, #tpu.dimension_semantics<parallel>], iteration_bounds = array<i64: 2, 1>, scalar_prefetch = 0 : i64, scratch_operands = 0 : i64, tpu.core_type = #tpu.core_type<tc>, window_params = [{transform_indices = @transform_0, window_bounds = array<i64: 1, 8, 32>}, {pipeline_mode = #tpu.pipeline_mode<synchronous>, transform_indices = @transform_1, window_bounds = array<i64: 32, 32>}, {transform_indices = @transform_2, window_bounds = array<i64: 1, 8, 32>}]} {
    %c0 = arith.constant 0 : index
    %c0_0 = arith.constant 0 : index
    %0 = vector.load %arg3[%c0, %c0_0] : memref<32x32xf32, #tpu.memory_space<vmem>>, vector<32x32xf32>
    %c0_1 = arith.constant 0 : index
    %c0_2 = arith.constant 0 : index
    %c0_3 = arith.constant 0 : index
    %1 = vector.load %arg2[%c0_1, %c0_2, %c0_3] : memref<1x8x32xf32, #tpu.memory_space<vmem>>, vector<1x8x32xf32>
    %2 = vector.shape_cast %1 : vector<1x8x32xf32> to vector<8x32xf32>
    %cst = arith.constant dense<0xFF800000> : vector<8xf32>
    %3 = vector.multi_reduction <maximumf>, %2, %cst [1] : vector<8x32xf32> to vector<8xf32>
    %4 = vector.shape_cast %3 : vector<8xf32> to vector<8x1xf32>
    %5 = vector.broadcast %4 : vector<8x1xf32> to vector<8x32xf32>
    %6 = arith.subf %2, %5 : vector<8x32xf32>
    %7 = math.exp %6 : vector<8x32xf32>
    %cst_4 = arith.constant dense<0.000000e+00> : vector<8xf32>
    %8 = vector.multi_reduction <add>, %7, %cst_4 [1] : vector<8x32xf32> to vector<8xf32>
    %9 = vector.shape_cast %8 : vector<8xf32> to vector<8x1xf32>
    %10 = tpu.reciprocal %9 : vector<8x1xf32> -> vector<8x1xf32>
    %11 = vector.broadcast %10 : vector<8x1xf32> to vector<8x32xf32>
    %12 = arith.mulf %7, %11 : vector<8x32xf32>
    %cst_5 = arith.constant dense<0.000000e+00> : vector<8x32xf32>
    %13 = tpu.matmul %12, %0, %cst_5 {dimension_numbers = #tpu.dot_dimension_numbers<[1], [0], [0], [1], [0, 0, 1, 1], [], []>} : vector<8x32xf32>, vector<32x32xf32>, vector<8x32xf32> -> vector<8x32xf32>
    %c0_6 = arith.constant 0 : index
    %c0_7 = arith.constant 0 : index
    %c0_8 = arith.constant 0 : index
    %14 = vector.load %arg4[%c0_6, %c0_7, %c0_8] : memref<1x8x32xf32, #tpu.memory_space<vmem>>, vector<1x8x32xf32>
    %15 = vector.shape_cast %14 : vector<1x8x32xf32> to vector<8x32xf32>
    %16 = vector.shape_cast %13 : vector<8x32xf32> to vector<1x8x32xf32>
    tpu.vector_store %arg4[%c0_6, %c0_7, %c0_8], %16 {strides = array<i32>} : memref<1x8x32xf32, #tpu.memory_space<vmem>>, vector<1x8x32xf32>,
    %c0_i32 = arith.constant 0 : i32
    %17 = arith.cmpi eq, %arg1, %c0_i32 : i32
    %18 = arith.extui %17 : i1 to i32
    %c0_i32_9 = arith.constant 0 : i32
    %19 = arith.cmpi ne, %18, %c0_i32_9 : i32
    scf.if %19 {
      %c0_10 = arith.constant 0 : index
      %c0_11 = arith.constant 0 : index
      %c0_12 = arith.constant 0 : index
      %20 = vector.load %arg2[%c0_10, %c0_11, %c0_12] : memref<1x8x32xf32, #tpu.memory_space<vmem>>, vector<1x1x32xf32>
      %21 = vector.shape_cast %20 : vector<1x1x32xf32> to vector<1x32xf32>
      %c0_13 = arith.constant 0 : index
      %c0_14 = arith.constant 0 : index
      %c0_15 = arith.constant 0 : index
      %22 = vector.load %arg4[%c0_13, %c0_14, %c0_15] : memref<1x8x32xf32, #tpu.memory_space<vmem>>, vector<1x1x32xf32>
      %23 = vector.shape_cast %22 : vector<1x1x32xf32> to vector<1x32xf32>
      %24 = vector.shape_cast %21 : vector<1x32xf32> to vector<1x1x32xf32>
      tpu.vector_store %arg4[%c0_13, %c0_14, %c0_15], %24 {strides = array<i32>} : memref<1x8x32xf32, #tpu.memory_space<vmem>>, vector<1x1x32xf32>,
    } else {
    }
    return
  }
  func.func @transform_0(%arg0: i32, %arg1: i32) -> (i32, i32, i32) {
    %c0_i32 = arith.constant 0 : i32
    %c0_i32_0 = arith.constant 0 : i32
    return %arg0, %arg1, %c0_i32 : i32, i32, i32
  }
  func.func @transform_1(%arg0: i32, %arg1: i32) -> (i32, i32) {
    %c0_i32 = arith.constant 0 : i32
    %c0_i32_0 = arith.constant 0 : i32
    %c0_i32_1 = arith.constant 0 : i32
    return %c0_i32, %c0_i32_0 : i32, i32
  }
  func.func @transform_2(%arg0: i32, %arg1: i32) -> (i32, i32, i32) {
    %c0_i32 = arith.constant 0 : i32
    %c0_i32_0 = arith.constant 0 : i32
    return %arg0, %arg1, %c0_i32 : i32, i32, i32
  }
}

</mosaic_0001>

<llo_original>
// kernel: tpu_custom_call.1
$region0: #{tpu_custom_call.1}
  #allocation0 [shape = 'u32[]', space=smem, size = 0x4, offset = 0x4, fixed_abs, tag = 'smem constant byte address 0x4 - core index']
  #allocation1 [shape = 'u32[144,128]{1,0:T(1,128)}', space=vmem, size = 0x12000, scoped, tag = 'internal scratch']
  %s0 = inlined_call_operand.hbm [shape: f32[2,8,32], index: 0, kind: input, shape index: {}]
  %s1 = inlined_call_operand.hbm [shape: f32[32,32], index: 1, kind: input, shape index: {}]
  %s2 = inlined_call_operand.hbm [shape: f32[2,8,32], index: 2, kind: output, shape index: {}]
  %s3 = sld [smem:[#allocation0]]
  $region53: #{tpu_custom_call.1} parent=0
    _
  %s5 = ssub.s32 1, %s3
  %s6 = scalar_select 0, %s5, %s3
  $region1: #{tpu_custom_call.1} parent=0
    #allocation2 [shape = 'u8[8192]{0}', space=vmem, size = 0x2000, scoped, tag = 'input window, operand 0']
    #allocation3 [shape = 's32[2]{0}', space=sflag, size = 0x8, scoped, tag = 'scoped memory for tpu_custom_call.1']
    #allocation4 [shape = 's32[2]{0}', space=sflag, size = 0x8, scoped, tag = 'scoped memory for tpu_custom_call.1']
    #allocation5 [shape = 'u8[16384]{0}', space=vmem, size = 0x4000, scoped, tag = 'input window, operand 1, single buffered']
    #allocation6 [shape = 's32[1]{0}', space=sflag, size = 0x4, scoped, tag = 'scoped memory for tpu_custom_call.1']
    #allocation7 [shape = 'u8[8192]{0}', space=vmem, size = 0x2000, scoped, tag = 'output window, operand 0']
    %7 = vsyncpa [#allocation3], 0
    %s8 = scalar_lea.sflag [#allocation3], 1
    %9 = vsyncpa %s8, 0
    %10 = vsyncpa [#allocation6], 0
    %11 = vsyncpa [#allocation4], 0
    %s12 = scalar_lea.sflag [#allocation4], 1
    %13 = vsyncpa %s12, 0
    loop: start=0, step=1, limit=4
    $region2: #{tpu_custom_call.1} parent=1 // loop_pre_header
      _
    $region3: #{tpu_custom_call.1} parent=1 // loop_header
      %s15 = sphi 0, %s19
      %p16 = scmp.ge.s32.totalorder %s15, 4
      %s22 = sphi 0, %s34
      %s23 = sphi 0, %s30
      %s24 = sphi 0, %s22
      %s25 = sphi 0, %s23
      %s26 = sphi 0, %s24
      %s27 = sphi 0, %s25
      %s39 = sphi 0, %s41
      %s42 = sphi 0, %s39
      %s43 = sphi 0, %s42
      %s59 = sphi 0, %s43
      %s63 = sphi 0, %s63
      %s65 = sphi 0, %s63
      %s66 = sphi 0, %s65
      %s80 = sphi 0, %s66
      %s88 = sphi 0, %s90
      %s91 = sphi 0, %s88
      %s92 = sphi 0, %s91
      %s108 = sphi 0, %s92
    $region4: #{tpu_custom_call.1} parent=1 // loop_header_branch
      %18 = sbr.rel (%p16) target = $region8
    $region5: #{tpu_custom_call.1} parent=1 // loop_body
      %s20 = ssub.s32 %s15, 1
      %s21 = ssub.s32 %s15, 2
      %s28 = sadd.s32 1, %s23
      %p29 = scmp.ge.s32.totalorder %s28, 1
      %s30 = scalar_select %p29, 0, %s28
      %s31 = sadd.s32 1, %s22
      %s32 = scalar_select %p29, %s31, %s22
      %p33 = scmp.ge.s32.totalorder %s32, 2
      %s34 = scalar_select %p33, 0, %s32
      %s35 = ssub.s32 %s22, %s34
      %s36 = ssub.s32 %s23, %s30
      %s37 = sor.u32 %s35, %s36
      %p38 = scmp.eq.s32.totalorder %s37, 0
      %s40 = sadd.s32 %s39, 1
      %s41 = scalar_select %p38, %s39, %s40
      %p44 = pneg %p38
      %p45 = scmp.eq.s32.totalorder %s15, 1
      %p46 = por %p44, %p45
      %p47 = scmp.ne.s32.totalorder %s39, %s42
      %p48 = scmp.eq.s32.totalorder %s15, 0
      %p49 = por %p47, %p48
      %p50 = scmp.ne.s32.totalorder %s39, %s42
      %p51 = scmp.eq.s32.totalorder %s20, 1
      %p52 = por %p50, %p51
      %p53 = scmp.ne.s32.totalorder %s42, %s43
      %p54 = scmp.eq.s32.totalorder %s20, 0
      %p55 = por %p53, %p54
      %p56 = scmp.ne.s32.totalorder %s42, %s43
      %p57 = scmp.eq.s32.totalorder %s21, 1
      %p58 = por %p56, %p57
      %p60 = scmp.ne.s32.totalorder %s43, %s59
      %p61 = scmp.eq.s32.totalorder %s21, 0
      %p62 = por %p60, %p61
      %s64 = sadd.s32 %s63, 1
      %p67 = scmp.eq.s32.totalorder %s15, 1
      %p68 = scmp.ne.s32.totalorder %s63, %s65
      %p69 = scmp.eq.s32.totalorder %s15, 0
      %p70 = por %p68, %p69
      %p71 = scmp.ne.s32.totalorder %s63, %s65
      %p72 = scmp.eq.s32.totalorder %s20, 1
      %p73 = por %p71, %p72
      %p74 = scmp.ne.s32.totalorder %s65, %s66
      %p75 = scmp.eq.s32.totalorder %s20, 0
      %p76 = por %p74, %p75
      %p77 = scmp.ne.s32.totalorder %s65, %s66
      %p78 = scmp.eq.s32.totalorder %s21, 1
      %p79 = por %p77, %p78
      %p81 = scmp.ne.s32.totalorder %s66, %s80
      %p82 = scmp.eq.s32.totalorder %s21, 0
      %p83 = por %p81, %p82
      %s84 = ssub.s32 %s22, %s34
      %s85 = ssub.s32 %s23, %s30
      %s86 = sor.u32 %s84, %s85
      %p87 = scmp.eq.s32.totalorder %s86, 0
      %s89 = sadd.s32 %s88, 1
      %s90 = scalar_select %p87, %s88, %s89
      %p93 = pneg %p87
      %p94 = scmp.eq.s32.totalorder %s15, 1
      %p95 = por %p93, %p94
      %p96 = scmp.ne.s32.totalorder %s88, %s91
      %p97 = scmp.eq.s32.totalorder %s15, 0
      %p98 = por %p96, %p97
      %p99 = scmp.ne.s32.totalorder %s88, %s91
      %p100 = scmp.eq.s32.totalorder %s20, 1
      %p101 = por %p99, %p100
      %p102 = scmp.ne.s32.totalorder %s91, %s92
      %p103 = scmp.eq.s32.totalorder %s20, 0
      %p104 = por %p102, %p103
      %p105 = scmp.ne.s32.totalorder %s91, %s92
      %p106 = scmp.eq.s32.totalorder %s21, 1
      %p107 = por %p105, %p106
      %p109 = scmp.ne.s32.totalorder %s92, %s108
      %p110 = scmp.eq.s32.totalorder %s21, 0
      %p111 = por %p109, %p110
      %p112 = scmp.le.s32.totalorder 1, %s15
      %p113 = scmp.lt.s32.totalorder %s15, 3
      %p114 = pnand %p112, %p113
      %p115 = pneg %p114
      // Predicated region
      $region9: #{tpu_custom_call.1} parent=5 // pred_check
        _
      $region10: #{tpu_custom_call.1} parent=5 // pred_check_branch
        %117 = sbr.rel (%p114) target = $region12
      $region11: #{tpu_custom_call.1} parent=5 // pred_region
        %s118 = ssub.s32 %s15, 1
        // Predicated region
        $region13: #{tpu_custom_call.1} parent=11 // pred_check
          %p119 = pneg %p76
        $region14: #{tpu_custom_call.1} parent=11 // pred_check_branch
          %121 = sbr.rel (%p119) target = $region16
        $region15: #{tpu_custom_call.1} parent=11 // pred_region
          %s123 = ssub.s32 512, 512
          %124 = vsyncadd [#allocation6], %s123
          %s125 = sshll.u32 [#allocation5], 4
          %s126 = int_to_ptr.vmem [resolvable:$true] %s125
          %131 = dma.hbm_to_vmem [thread:$0]  %s1, 512, %s126, [#allocation6], 128, 128, 8
        $region16: #{tpu_custom_call.1} parent=11 // pred_fallthru
          _
      $region12: #{tpu_custom_call.1} parent=5 // pred_fallthru
        _
      %p132 = scmp.lt.s32.totalorder %s15, 2
      // Predicated region
      $region17: #{tpu_custom_call.1} parent=5 // pred_check
        %p133 = pneg %p132
      $region18: #{tpu_custom_call.1} parent=5 // pred_check_branch
        %135 = sbr.rel (%p133) target = $region20
      $region19: #{tpu_custom_call.1} parent=5 // pred_region
        // Predicated region
        $region21: #{tpu_custom_call.1} parent=19 // pred_check
          %p136 = pneg %p49
        $region22: #{tpu_custom_call.1} parent=19 // pred_check_branch
          %138 = sbr.rel (%p136) target = $region24
        $region23: #{tpu_custom_call.1} parent=19 // pred_region
          %s139 = sand.u32 %s39, 1
          %s140 = scalar_lea.sflag [#allocation3], %s139
          %s141 = sand.u32 %s39, 1
          %s142 = smul.addr %s141, 8
          %s143 = scalar_lea.vmem [#allocation2], %s142
          %s145 = ssub.s32 128, 128
          %146 = vsyncadd %s140, %s145
          %s147 = sadd.s32 %s23, %s22
          %s148 = smul.addr %s147, 128
          %s149 = scalar_lea.hbm %s0, %s148
          %s151 = sshll.u32 %s143, 4
          %s152 = int_to_ptr.vmem [resolvable:$true] %s151
          %154 = dma.hbm_to_vmem [thread:$0]  %s149, 128, %s152, %s140
        $region24: #{tpu_custom_call.1} parent=19 // pred_fallthru
          _
      $region20: #{tpu_custom_call.1} parent=5 // pred_fallthru
        _
      %p155 = scmp.le.s32.totalorder 1, %s15
      %p156 = scmp.lt.s32.totalorder %s15, 3
      %p157 = pnand %p155, %p156
      %p158 = pneg %p157
      // Predicated region
      $region25: #{tpu_custom_call.1} parent=5 // pred_check
        _
      $region26: #{tpu_custom_call.1} parent=5 // pred_check_branch
        %160 = sbr.rel (%p157) target = $region28
      $region27: #{tpu_custom_call.1} parent=5 // pred_region
        %s161 = ssub.s32 %s15, 1
        %s162 = sand.u32 %s42, 1
        %s163 = scalar_lea.sflag [#allocation3], %s162
        %s164 = sand.u32 %s42, 1
        %s165 = smul.addr %s164, 8
        %s166 = scalar_lea.vmem [#allocation2], %s165
        // Predicated region
        $region29: #{tpu_custom_call.1} parent=27 // pred_check
          %p167 = pneg %p55
        $region30: #{tpu_custom_call.1} parent=27 // pred_check_branch
          %169 = sbr.rel (%p167) target = $region32
        $region31: #{tpu_custom_call.1} parent=27 // pred_region
          %170 = dma.done %s163, 128
        $region32: #{tpu_custom_call.1} parent=27 // pred_fallthru
          _
        // Predicated region
        $region33: #{tpu_custom_call.1} parent=27 // pred_check
          %p171 = pneg %p76
        $region34: #{tpu_custom_call.1} parent=27 // pred_check_branch
          %173 = sbr.rel (%p171) target = $region36
        $region35: #{tpu_custom_call.1} parent=27 // pred_region
          %174 = dma.done [#allocation6], 512
        $region36: #{tpu_custom_call.1} parent=27 // pred_fallthru
          _
        %s175 = sand.u32 %s42, 1
        %s176 = scalar_lea.sflag [#allocation3], %s175
        %s177 = sand.u32 %s42, 1
        %s178 = smul.addr %s177, 8
        %s179 = scalar_lea.vmem [#allocation2], %s178
        %p180 = pneg %p55
        %p181 = pneg %p52
        %p182 = pneg %p76
        %p183 = pneg %p73
        %p184 = pneg %p104
        %p185 = pneg %p101
        %s186 = sand.u32 %s91, 1
        %s187 = scalar_lea.sflag [#allocation4], %s186
        %s188 = sand.u32 %s91, 1
        %s189 = smul.addr %s188, 8
        %s190 = scalar_lea.vmem [#allocation7], %s189
        %v191 = vld [vmem:[#allocation5] sm:$0xff]
        %v192 = vld [vmem:[#allocation5 + $0x8] sm:$0xff]
        %v193 = vld [vmem:[#allocation5 + $0x10] sm:$0xff]
        %v194 = vld [vmem:[#allocation5 + $0x18] sm:$0xff]
        %v195 = vld [vmem:[%s166] sm:$0xff]
        %vm196 = vcmask 261120
        %v197 = vsel %vm196, %v195, -inf
        %198 = vmax.xlane.f32.xlu0 %v197
        %v199 = vpop.xlane.xlu0 %198
        %v200 = vsub.f32 %v195, %v199
        %v201 = vmul.f32 %v200, 1.442695
        %v202 = vpow.pop %v201
        %v203 = vsel %vm196, %v202, 0.0
        %204 = vadd.xlane.f32.xlu0 %v203
        %v205 = vpop.xlane.xlu0 %204
        %v206 = vrcp.pop %v205
        %v207 = vmul.f32 %v202, %v206
        %v209 = vsel %vm196, %v207, 0
        %211 = vmatprep.subr.mxu0 0.0
        %212 = vmatpush1.msra.mxu0 %v191
        %213 = vmatprep.subr.mxu0 0.0
        %214 = vmatpush1.msra.mxu0 %v192
        %215 = vmatprep.subr.mxu0 0.0
        %216 = vmatpush1.msra.mxu0 %v193
        %217 = vmatprep.subr.mxu0 0.0
        %218 = vmatpush1.msra.mxu0 %v194
        %219 = vmatprep.subr.mxu0 0.0
        %220 = vmatpush1.msra.mxu0 0.0
        %221 = vmatprep.subr.mxu0 0.0
        %222 = vmatpush1.msra.mxu0 0.0
        %223 = vmatprep.subr.mxu0 0.0
        %224 = vmatpush1.msra.mxu0 0.0
        %225 = vmatprep.subr.mxu0 0.0
        %226 = vmatpush1.msra.mxu0 0.0
        %227 = vmatprep.subr.mxu0 0.0
        %228 = vmatpush1.msra.mxu0 0.0
        %229 = vmatprep.subr.mxu0 0.0
        %230 = vmatpush1.msra.mxu0 0.0
        %231 = vmatprep.subr.mxu0 0.0
        %232 = vmatpush1.msra.mxu0 0.0
        %233 = vmatprep.subr.mxu0 0.0
        %234 = vmatpush1.msra.mxu0 0.0
        %235 = vmatprep.subr.mxu0 0.0
        %236 = vmatpush1.msra.mxu0 0.0
        %237 = vmatprep.subr.mxu0 0.0
        %238 = vmatpush1.msra.mxu0 0.0
        %239 = vmatprep.subr.mxu0 0.0
        %240 = vmatpush1.msra.mxu0 0.0
        %241 = vmatprep.subr.mxu0 0.0
        %242 = vmatpush1.msra.mxu0 0.0
        %243 = vmatprep.subr.mxu0 0.0
        %244 = vmatpush1.msra.mxu0 0.0
        %245 = vmatprep.subr.mxu0 0.0
        %246 = vmatpush1.msra.mxu0 0.0
        %247 = vmatprep.subr.mxu0 0.0
        %248 = vmatpush1.msra.mxu0 0.0
        %249 = vmatprep.subr.mxu0 0.0
        %250 = vmatpush1.msra.mxu0 0.0
        %251 = vmatprep.subr.mxu0 0.0
        %252 = vmatpush1.msra.mxu0 0.0
        %253 = vmatprep.subr.mxu0 0.0
        %254 = vmatpush1.msra.mxu0 0.0
        %255 = vmatprep.subr.mxu0 0.0
        %256 = vmatpush1.msra.mxu0 0.0
        %257 = vmatprep.subr.mxu0 0.0
        %258 = vmatpush1.msra.mxu0 0.0
        %259 = vmatprep.subr.mxu0 0.0
        %260 = vmatpush1.msra.mxu0 0.0
        %261 = vmatprep.subr.mxu0 0.0
        %262 = vmatpush1.msra.mxu0 0.0
        %263 = vmatprep.subr.mxu0 0.0
        %264 = vmatpush1.msra.mxu0 0.0
        %265 = vmatprep.subr.mxu0 0.0
        %266 = vmatpush1.msra.mxu0 0.0
        %267 = vmatprep.subr.mxu0 0.0
        %268 = vmatpush1.msra.mxu0 0.0
        %269 = vmatprep.subr.mxu0 0.0
        %270 = vmatpush1.msra.mxu0 0.0
        %271 = vmatprep.subr.mxu0 0.0
        %272 = vmatpush1.msra.mxu0 0.0
        %273 = vmatprep.subr.mxu0 0.0
        %274 = vmatpush1.msra.mxu0 0.0
        %275 = vmatprep.mubr.f32.mxu0 0.0
        %276 = vmatmul.mubr.f32.gmra.mrb[0].mxu0 %v209
        %v277 = vpop.f32.mrb[0].mxu0
        %v278 = vadd.f32 0.0, %v277
        %v279 = vpop.f32.mrb[0].mxu0
        %280 = vdwg.mxu0
        %281 = vst.msk [vmem:[%s190] sm:$0xff] %vm196, %v278
        %p282 = scmp.eq.s32.totalorder %s25, 0
        // Predicated region
        $region37: #{tpu_custom_call.1} parent=27 // pred_check
          %p283 = pneg %p282
        $region38: #{tpu_custom_call.1} parent=27 // pred_check_branch
          %285 = sbr.rel (%p283) target = $region40
        $region39: #{tpu_custom_call.1} parent=27 // pred_region
          %v286 = vld [vmem:[%s166] sm:$0x1]
          %vm287 = vcmask 253952
          %288 = vst.msk [vmem:[%s190] sm:$0x1] %vm287, %v286
        $region40: #{tpu_custom_call.1} parent=27 // pred_fallthru
          _
        %s289 = sand.u32 %s91, 1
        %s290 = scalar_lea.sflag [#allocation4], %s289
        %s291 = sand.u32 %s91, 1
        %s292 = smul.addr %s291, 8
        %s293 = scalar_lea.vmem [#allocation7], %s292
        // Predicated region
        $region41: #{tpu_custom_call.1} parent=27 // pred_check
          %p294 = pneg %p101
        $region42: #{tpu_custom_call.1} parent=27 // pred_check_branch
          %296 = sbr.rel (%p294) target = $region44
        $region43: #{tpu_custom_call.1} parent=27 // pred_region
          %s298 = ssub.s32 128, 128
          %299 = vsyncadd %s290, %s298
          %s300 = sadd.s32 %s25, %s24
          %s301 = smul.addr %s300, 128
          %s302 = scalar_lea.hbm %s2, %s301
          %s304 = sshll.u32 %s293, 4
          %s305 = int_to_ptr.vmem [resolvable:$true] %s304
          %307 = dma.vmem_to_hbm [thread:$0]  %s305, 128, %s302, %s290
        $region44: #{tpu_custom_call.1} parent=27 // pred_fallthru
          _
      $region28: #{tpu_custom_call.1} parent=5 // pred_fallthru
        _
      %p308 = scmp.le.s32.totalorder 2, %s15
      // Predicated region
      $region45: #{tpu_custom_call.1} parent=5 // pred_check
        %p309 = pneg %p308
      $region46: #{tpu_custom_call.1} parent=5 // pred_check_branch
        %311 = sbr.rel (%p309) target = $region48
      $region47: #{tpu_custom_call.1} parent=5 // pred_region
        %s312 = ssub.s32 %s15, 2
        // Predicated region
        $region49: #{tpu_custom_call.1} parent=47 // pred_check
          %p313 = pneg %p107
        $region50: #{tpu_custom_call.1} parent=47 // pred_check_branch
          %315 = sbr.rel (%p313) target = $region52
        $region51: #{tpu_custom_call.1} parent=47 // pred_region
          %s316 = sand.u32 %s92, 1
          %s317 = scalar_lea.sflag [#allocation4], %s316
          %s318 = sand.u32 %s92, 1
          %s319 = smul.addr %s318, 8
          %s320 = scalar_lea.vmem [#allocation7], %s319
          %321 = dma.done %s317, 128
        $region52: #{tpu_custom_call.1} parent=47 // pred_fallthru
          _
      $region48: #{tpu_custom_call.1} parent=5 // pred_fallthru
        _
    $region6: #{tpu_custom_call.1} parent=1 // loop_footer
      %s19 = sadd.s32 1, %s15
    $region7: #{tpu_custom_call.1} parent=1 // loop_footer_branch
      %14 = sbr.rel target = $region3
    $region8: #{tpu_custom_call.1} parent=1 // loop_exit
      _
    %322 = vsyncpa [#allocation3], 1
    %s323 = scalar_lea.sflag [#allocation3], 1
    %324 = vsyncpa %s323, 1
    %325 = vsyncpa [#allocation6], 1
    %326 = vsyncpa [#allocation4], 1
    %s327 = scalar_lea.sflag [#allocation4], 1
    %328 = vsyncpa %s327, 1

</llo_original>
